<compile_context>
chip_gen: v6e
topology: v6e:2x2x1
jax: 0.10.0
libtpu: 0.0.40
codegen_flags: <defaults>
</compile_context>

<pallas_src>
import jax
import jax.numpy as jnp
from jax.experimental import pallas as pl
from jax.experimental.pallas import tpu as pltpu


def _round_up(x: int, m: int) -> int:
    return (x + m - 1) // m * m


def _ffn_kernel(x_ref, w13_ref, w2_ref, o_ref):
    x = x_ref[...]                                              # (tm, Dp)
    w13 = w13_ref[...]                                          # (Dp, 2*Hp)

    # Fused w1/w3 projection, f32 accumulation on the MXU.
    h13 = jnp.dot(x, w13, preferred_element_type=jnp.float32)   # (tm, 2*Hp)
    hp = h13.shape[1] // 2
    h1 = h13[:, :hp]                                            # lane-aligned slice
    h3 = h13[:, hp:]

    # SwiGLU gate in f32 (sigmoid hits the EUP slot).
    gated = (h1 * jax.nn.sigmoid(h1)) * h3                      # (tm, Hp)

    out = jnp.dot(gated.astype(w2_ref.dtype), w2_ref[...],
                  preferred_element_type=jnp.float32)           # (tm, Dp)

    # TODO(synk): dropout omitted -- nn.Dropout is identity in the
    # deterministic / eval forward; a training path would use
    # pltpu.prng_seed + pltpu.prng_random_bits.
    o_ref[...] = out.astype(o_ref.dtype)


def feed_forward(x, w1, w2, w3, *, tm=256):
    """SwiGLU FFN.

    x : (..., D)
    w1: (H, D)   torch nn.Linear(dim, hidden_dim, bias=False).weight
    w2: (D, H)   torch nn.Linear(hidden_dim, dim, bias=False).weight
    w3: (H, D)   torch nn.Linear(dim, hidden_dim, bias=False).weight
    returns (..., D) in x.dtype.
    """
    *lead, D = x.shape
    H = w1.shape[0]
    dt = x.dtype

    x2 = x.reshape(-1, D)
    T = x2.shape[0]

    # Pad to lane/MXU-friendly sizes (multiples of 128); pad tokens to a
    # multiple of the token tile (tile second-to-last dim must be 8-aligned).
    Dp = _round_up(D, 128)
    Hp = _round_up(H, 128)
    tm_eff = min(tm, _round_up(T, 8))
    Tp = _round_up(T, tm_eff)

    xp = jnp.zeros((Tp, Dp), dt).at[:T, :D].set(x2)

    # Fuse w1/w3 into one [in, out] = (Dp, 2*Hp) matrix; transpose w2 to (Hp, Dp).
    w13 = jnp.zeros((Dp, 2 * Hp), dt)
    w13 = w13.at[:D, :H].set(w1.T.astype(dt))
    w13 = w13.at[:D, Hp:Hp + H].set(w3.T.astype(dt))
    w2p = jnp.zeros((Hp, Dp), dt).at[:H, :D].set(w2.T.astype(dt))

    # VMEM budget for this tiling: double-buffered x/out tiles, resident fused
    # weights (assume 2 buffers each), f32 intermediates; ~2x headroom.
    itemsize = jnp.dtype(dt).itemsize
    est = (2 * 2 * tm_eff * Dp * itemsize                   # x + out, double-buffered
           + 2 * (Dp * 2 * Hp + Hp * Dp) * itemsize         # resident weights
           + tm_eff * 3 * Hp * 4)                           # f32 h13 + gate
    vmem_limit = int(min(max(2 * est, 8 * 1024 * 1024), 100 * 1024 * 1024))

    out = pl.pallas_call(
        _ffn_kernel,
        out_shape=jax.ShapeDtypeStruct((Tp, Dp), dt),
        grid=(Tp // tm_eff,),
        in_specs=[
            pl.BlockSpec((tm_eff, Dp), lambda i: (i, 0)),    # token tile, pipelined
            pl.BlockSpec((Dp, 2 * Hp), lambda i: (0, 0)),    # fused w1/w3, resident
            pl.BlockSpec((Hp, Dp), lambda i: (0, 0)),        # w2, resident
        ],
        out_specs=pl.BlockSpec((tm_eff, Dp), lambda i: (i, 0)),
        compiler_params=pltpu.CompilerParams(
            dimension_semantics=("parallel",),
            vmem_limit_bytes=vmem_limit),
    )(xp, w13, w2p)

    return out[:T, :D].reshape(*lead, D)


def _ffn_reference(x, w1, w2, w3):
    h1 = x @ w1.T
    h3 = x @ w3.T
    return ((h1 * jax.nn.sigmoid(h1)) * h3) @ w2.T


if __name__ == "__main__":
    # Module hyper-params (hidden_dim=None path of __init__):
    dim = 32
    multiple_of = 32
    hidden_dim = 4 * dim
    hidden_dim = int(2 * hidden_dim / 3)
    hidden_dim = multiple_of * ((hidden_dim + multiple_of - 1) // multiple_of)  # -> 96

    batch, seq = 2, 8
    key = jax.random.PRNGKey(0)
    kx, k1, k2, k3 = jax.random.split(key, 4)

    x = jax.random.normal(kx, (batch, seq, dim), dtype=jnp.float32)

    # nn.Linear(in, out, bias=False) weight is (out, in); init U(-1/sqrt(in), 1/sqrt(in)).
    def linear_weight(k, in_f, out_f):
        bound = 1.0 / (in_f ** 0.5)
        return jax.random.uniform(k, (out_f, in_f), jnp.float32, -bound, bound)

    w1 = linear_weight(k1, dim, hidden_dim)       # (H, D)
    w2 = linear_weight(k2, hidden_dim, dim)       # (D, H)
    w3 = linear_weight(k3, dim, hidden_dim)       # (H, D)

    ref = _ffn_reference(x.reshape(-1, dim), w1, w2, w3).reshape(batch, seq, dim)

    # f32 path: tight check vs the pure-JAX reference.
    out = jax.block_until_ready(feed_forward(x, w1, w2, w3))
    assert out.shape == (batch, seq, dim)
    assert jnp.allclose(out, ref, atol=1e-5, rtol=1e-5), "f32 mismatch vs reference"

    # bf16 path (production dtype: bf16 MXU rate, half the memory traffic),
    # f32 accumulation inside the kernel -> loose tolerance vs f32 reference.
    outb = jax.block_until_ready(
        feed_forward(x.astype(jnp.bfloat16),
                     w1.astype(jnp.bfloat16),
                     w2.astype(jnp.bfloat16),
                     w3.astype(jnp.bfloat16)))
    assert outb.shape == (batch, seq, dim)
    assert jnp.allclose(outb.astype(jnp.float32), ref, atol=2e-2, rtol=2e-2), \
        "bf16 mismatch vs reference"

    print("KERNEL_OK")
</pallas_src>

<mosaic_0001>
module attributes {stable_mosaic.version = 11 : i64} {
  func.func @_ffn_kernel(%arg0: i32, %arg1: memref<16x128xf32, #tpu.memory_space<vmem>>, %arg2: memref<128x256xf32, #tpu.memory_space<vmem>>, %arg3: memref<128x128xf32, #tpu.memory_space<vmem>>, %arg4: memref<16x128xf32, #tpu.memory_space<vmem>>) attributes {dimension_semantics = [#tpu.dimension_semantics<parallel>], iteration_bounds = array<i64: 1>, scalar_prefetch = 0 : i64, scratch_operands = 0 : i64, tpu.core_type = #tpu.core_type<tc>, window_params = [{transform_indices = @transform_0, window_bounds = array<i64: 16, 128>}, {pipeline_mode = #tpu.pipeline_mode<synchronous>, transform_indices = @transform_1, window_bounds = array<i64: 128, 256>}, {pipeline_mode = #tpu.pipeline_mode<synchronous>, transform_indices = @transform_2, window_bounds = array<i64: 128, 128>}, {transform_indices = @transform_3, window_bounds = array<i64: 16, 128>}]} {
    %c0 = arith.constant 0 : index
    %c0_0 = arith.constant 0 : index
    %0 = vector.load %arg1[%c0, %c0_0] : memref<16x128xf32, #tpu.memory_space<vmem>>, vector<16x128xf32>
    %c0_1 = arith.constant 0 : index
    %c0_2 = arith.constant 0 : index
    %1 = vector.load %arg2[%c0_1, %c0_2] : memref<128x256xf32, #tpu.memory_space<vmem>>, vector<128x256xf32>
    %cst = arith.constant dense<0.000000e+00> : vector<16x256xf32>
    %2 = tpu.matmul %0, %1, %cst {dimension_numbers = #tpu.dot_dimension_numbers<[1], [0], [0], [1], [0, 0, 1, 1], [], []>} : vector<16x128xf32>, vector<128x256xf32>, vector<16x256xf32> -> vector<16x256xf32>
    %3 = vector.extract_strided_slice %2 {offsets = [0, 0], sizes = [16, 128], strides = [1, 1]} : vector<16x256xf32> to vector<16x128xf32>
    %4 = vector.extract_strided_slice %2 {offsets = [0, 128], sizes = [16, 128], strides = [1, 1]} : vector<16x256xf32> to vector<16x128xf32>
    %5 = arith.negf %3 : vector<16x128xf32>
    %6 = math.exp %5 : vector<16x128xf32>
    %cst_3 = arith.constant 1.000000e+00 : f32
    %7 = vector.broadcast %cst_3 : f32 to vector<16x128xf32>
    %8 = arith.addf %7, %6 : vector<16x128xf32>
    %9 = arith.divf %7, %8 : vector<16x128xf32>
    %10 = arith.mulf %3, %9 : vector<16x128xf32>
    %11 = arith.mulf %10, %4 : vector<16x128xf32>
    %c0_4 = arith.constant 0 : index
    %c0_5 = arith.constant 0 : index
    %12 = vector.load %arg3[%c0_4, %c0_5] : memref<128x128xf32, #tpu.memory_space<vmem>>, vector<128x128xf32>
    %cst_6 = arith.constant dense<0.000000e+00> : vector<16x128xf32>
    %13 = tpu.matmul %11, %12, %cst_6 {dimension_numbers = #tpu.dot_dimension_numbers<[1], [0], [0], [1], [0, 0, 1, 1], [], []>} : vector<16x128xf32>, vector<128x128xf32>, vector<16x128xf32> -> vector<16x128xf32>
    %c0_7 = arith.constant 0 : index
    %c0_8 = arith.constant 0 : index
    %14 = vector.load %arg4[%c0_7, %c0_8] : memref<16x128xf32, #tpu.memory_space<vmem>>, vector<16x128xf32>
    tpu.vector_store %arg4[%c0_7, %c0_8], %13 {strides = array<i32>} : memref<16x128xf32, #tpu.memory_space<vmem>>, vector<16x128xf32>,
    return
  }
  func.func @transform_0(%arg0: i32) -> (i32, i32) {
    %c0_i32 = arith.constant 0 : i32
    %c0_i32_0 = arith.constant 0 : i32
    return %arg0, %c0_i32 : i32, i32
  }
  func.func @transform_1(%arg0: i32) -> (i32, i32) {
    %c0_i32 = arith.constant 0 : i32
    %c0_i32_0 = arith.constant 0 : i32
    %c0_i32_1 = arith.constant 0 : i32
    return %c0_i32, %c0_i32_0 : i32, i32
  }
  func.func @transform_2(%arg0: i32) -> (i32, i32) {
    %c0_i32 = arith.constant 0 : i32
    %c0_i32_0 = arith.constant 0 : i32
    %c0_i32_1 = arith.constant 0 : i32
    return %c0_i32, %c0_i32_0 : i32, i32
  }
  func.func @transform_3(%arg0: i32) -> (i32, i32) {
    %c0_i32 = arith.constant 0 : i32
    %c0_i32_0 = arith.constant 0 : i32
    return %arg0, %c0_i32 : i32, i32
  }
}

</mosaic_0001>

<llo_original>
// kernel: tpu_custom_call.1
$region0: #{tpu_custom_call.1}
  #allocation0 [shape = 'u32[]', space=smem, size = 0x4, offset = 0x4, fixed_abs, tag = 'smem constant byte address 0x4 - core index']
  #allocation1 [shape = 'u32[144,128]{1,0:T(1,128)}', space=vmem, size = 0x12000, scoped, tag = 'internal scratch']
  %s0 = inlined_call_operand.hbm [shape: f32[16,128], index: 0, kind: input, shape index: {}]
  %s1 = inlined_call_operand.hbm [shape: f32[128,256], index: 1, kind: input, shape index: {}]
  %s2 = inlined_call_operand.hbm [shape: f32[128,128], index: 2, kind: input, shape index: {}]
  %s3 = inlined_call_operand.hbm [shape: f32[16,128], index: 3, kind: output, shape index: {}]
  %s4 = sld [smem:[#allocation0]]
  $region34: #{tpu_custom_call.1} parent=0
    _
  %s6 = ssub.s32 1, %s4
  %s7 = scalar_select 0, %s6, %s4
  $region1: #{tpu_custom_call.1} parent=0
    #allocation2 [shape = 'u8[8192]{0}', space=vmem, size = 0x2000, scoped, tag = 'input window, operand 0, single buffered']
    #allocation3 [shape = 's32[1]{0}', space=sflag, size = 0x4, scoped, tag = 'scoped memory for tpu_custom_call.1']
    #allocation4 [shape = 's32[1]{0}', space=sflag, size = 0x4, scoped, tag = 'scoped memory for tpu_custom_call.1']
    #allocation5 [shape = 'u8[131072]{0}', space=vmem, size = 0x20000, scoped, tag = 'input window, operand 1, single buffered']
    #allocation6 [shape = 's32[1]{0}', space=sflag, size = 0x4, scoped, tag = 'scoped memory for tpu_custom_call.1']
    #allocation7 [shape = 'u8[65536]{0}', space=vmem, size = 0x10000, scoped, tag = 'input window, operand 2, single buffered']
    #allocation8 [shape = 'u8[8192]{0}', space=vmem, size = 0x2000, scoped, tag = 'output window, operand 0, single buffered']
    %8 = vsyncpa [#allocation3], 0
    %9 = vsyncpa [#allocation6], 0
    %10 = vsyncpa [#allocation4], 0
    // Predicated region
    $region2: #{tpu_custom_call.1} parent=1 // pred_check
      _
    $region3: #{tpu_custom_call.1} parent=1 // pred_check_branch
      %12 = sbr.rel (0) target = $region5
    $region4: #{tpu_custom_call.1} parent=1 // pred_region
      %s14 = ssub.s32 256, 256
      %15 = vsyncadd [#allocation3], %s14
      %s16 = sshll.u32 [#allocation2], 4
      %s17 = int_to_ptr.vmem [resolvable:$true] %s16
      %22 = dma.hbm_to_vmem [thread:$0]  %s0, 256, %s17, [#allocation3], 128, 128, 8
    $region5: #{tpu_custom_call.1} parent=1 // pred_fallthru
      _
    // Predicated region
    $region6: #{tpu_custom_call.1} parent=1 // pred_check
      _
    $region7: #{tpu_custom_call.1} parent=1 // pred_check_branch
      %24 = sbr.rel (0) target = $region9
    $region8: #{tpu_custom_call.1} parent=1 // pred_region
      %s26 = ssub.s32 4096, 4096
      %27 = vsyncadd [#allocation6], %s26
      %s28 = sshll.u32 [#allocation5], 4
      %s29 = int_to_ptr.vmem [resolvable:$true] %s28
      %34 = dma.hbm_to_vmem [thread:$0]  %s1, 4096, %s29, [#allocation6], 256, 256, 16
    $region9: #{tpu_custom_call.1} parent=1 // pred_fallthru
      _
    // Predicated region
    $region10: #{tpu_custom_call.1} parent=1 // pred_check
      _
    $region11: #{tpu_custom_call.1} parent=1 // pred_check_branch
      %36 = sbr.rel (0) target = $region13
    $region12: #{tpu_custom_call.1} parent=1 // pred_region
      %s38 = ssub.s32 2048, 2048
      %39 = vsyncadd [#allocation6], %s38
      %s40 = sshll.u32 [#allocation7], 4
      %s41 = int_to_ptr.vmem [resolvable:$true] %s40
      %46 = dma.hbm_to_vmem [thread:$0]  %s2, 2048, %s41, [#allocation6], 128, 128, 8
    $region13: #{tpu_custom_call.1} parent=1 // pred_fallthru
      _
    // Predicated region
    $region14: #{tpu_custom_call.1} parent=1 // pred_check
      _
    $region15: #{tpu_custom_call.1} parent=1 // pred_check_branch
      %48 = sbr.rel (0) target = $region17
    $region16: #{tpu_custom_call.1} parent=1 // pred_region
      %49 = dma.done [#allocation3], 256
    $region17: #{tpu_custom_call.1} parent=1 // pred_fallthru
      _
    // Predicated region
    $region18: #{tpu_custom_call.1} parent=1 // pred_check
      _
    $region19: #{tpu_custom_call.1} parent=1 // pred_check_branch
      %51 = sbr.rel (0) target = $region21
    $region20: #{tpu_custom_call.1} parent=1 // pred_region
      %52 = dma.done [#allocation6], 4096
    $region21: #{tpu_custom_call.1} parent=1 // pred_fallthru
      _
    // Predicated region
    $region22: #{tpu_custom_call.1} parent=1 // pred_check
      _
    $region23: #{tpu_custom_call.1} parent=1 // pred_check_branch
      %54 = sbr.rel (0) target = $region25
    $region24: #{tpu_custom_call.1} parent=1 // pred_region
      %55 = dma.done [#allocation6], 2048
    $region25: #{tpu_custom_call.1} parent=1 // pred_fallthru
      _
    %v56 = vld [vmem:[#allocation2] sm:$0xff]
    %v57 = vld [vmem:[#allocation2 + $0x8] sm:$0xff]
    %v58 = vld [vmem:[#allocation5] sm:$0xff]
    %v59 = vld [vmem:[#allocation5 + $0x8] sm:$0xff]
    %v60 = vld [vmem:[#allocation5 + $0x10] sm:$0xff]
    %v61 = vld [vmem:[#allocation5 + $0x18] sm:$0xff]
    %v62 = vld [vmem:[#allocation5 + $0x20] sm:$0xff]
    %v63 = vld [vmem:[#allocation5 + $0x28] sm:$0xff]
    %v64 = vld [vmem:[#allocation5 + $0x30] sm:$0xff]
    %v65 = vld [vmem:[#allocation5 + $0x38] sm:$0xff]
    %v66 = vld [vmem:[#allocation5 + $0x40] sm:$0xff]
    %v67 = vld [vmem:[#allocation5 + $0x48] sm:$0xff]
    %v68 = vld [vmem:[#allocation5 + $0x50] sm:$0xff]
    %v69 = vld [vmem:[#allocation5 + $0x58] sm:$0xff]
    %v70 = vld [vmem:[#allocation5 + $0x60] sm:$0xff]
    %v71 = vld [vmem:[#allocation5 + $0x68] sm:$0xff]
    %v72 = vld [vmem:[#allocation5 + $0x70] sm:$0xff]
    %v73 = vld [vmem:[#allocation5 + $0x78] sm:$0xff]
    %v74 = vld [vmem:[#allocation5 + $0x80] sm:$0xff]
    %v75 = vld [vmem:[#allocation5 + $0x88] sm:$0xff]
    %v76 = vld [vmem:[#allocation5 + $0x90] sm:$0xff]
    %v77 = vld [vmem:[#allocation5 + $0x98] sm:$0xff]
    %v78 = vld [vmem:[#allocation5 + $0xa0] sm:$0xff]
    %v79 = vld [vmem:[#allocation5 + $0xa8] sm:$0xff]
    %v80 = vld [vmem:[#allocation5 + $0xb0] sm:$0xff]
    %v81 = vld [vmem:[#allocation5 + $0xb8] sm:$0xff]
    %v82 = vld [vmem:[#allocation5 + $0xc0] sm:$0xff]
    %v83 = vld [vmem:[#allocation5 + $0xc8] sm:$0xff]
    %v84 = vld [vmem:[#allocation5 + $0xd0] sm:$0xff]
    %v85 = vld [vmem:[#allocation5 + $0xd8] sm:$0xff]
    %v86 = vld [vmem:[#allocation5 + $0xe0] sm:$0xff]
    %v87 = vld [vmem:[#allocation5 + $0xe8] sm:$0xff]
    %v88 = vld [vmem:[#allocation5 + $0xf0] sm:$0xff]
    %v89 = vld [vmem:[#allocation5 + $0xf8] sm:$0xff]
    %90 = vmatprep.subr.mxu0 %v89
    %91 = vmatpush1.msra.mxu0 %v88
    %92 = vmatprep.subr.mxu0 %v87
    %93 = vmatpush1.msra.mxu0 %v86
    %94 = vmatprep.subr.mxu0 %v85
    %95 = vmatpush1.msra.mxu0 %v84
    %96 = vmatprep.subr.mxu0 %v83
    %97 = vmatpush1.msra.mxu0 %v82
    %98 = vmatprep.subr.mxu0 %v81
    %99 = vmatpush1.msra.mxu0 %v80
    %100 = vmatprep.subr.mxu0 %v79
    %101 = vmatpush1.msra.mxu0 %v78
    %102 = vmatprep.subr.mxu0 %v77
    %103 = vmatpush1.msra.mxu0 %v76
    %104 = vmatprep.subr.mxu0 %v75
    %105 = vmatpush1.msra.mxu0 %v74
    %106 = vmatprep.subr.mxu0 %v73
    %107 = vmatpush1.msra.mxu0 %v72
    %108 = vmatprep.subr.mxu0 %v71
    %109 = vmatpush1.msra.mxu0 %v70
    %110 = vmatprep.subr.mxu0 %v69
    %111 = vmatpush1.msra.mxu0 %v68
    %112 = vmatprep.subr.mxu0 %v67
    %113 = vmatpush1.msra.mxu0 %v66
    %114 = vmatprep.subr.mxu0 %v65
    %115 = vmatpush1.msra.mxu0 %v64
    %116 = vmatprep.subr.mxu0 %v63
    %117 = vmatpush1.msra.mxu0 %v62
    %118 = vmatprep.subr.mxu0 %v61
    %119 = vmatpush1.msra.mxu0 %v60
    %120 = vmatprep.subr.mxu0 %v59
    %121 = vmatpush1.msra.mxu0 %v58
    %122 = vmatprep.subr.mxu0 0.0
    %123 = vmatpush2.msra.mxu0 0.0
    %124 = vmatprep.subr.mxu0 0.0
    %125 = vmatpush2.msra.mxu0 0.0
    %126 = vmatprep.subr.mxu0 0.0
    %127 = vmatpush2.msra.mxu0 0.0
    %128 = vmatprep.subr.mxu0 0.0
    %129 = vmatpush2.msra.mxu0 0.0
    %130 = vmatprep.subr.mxu0 0.0
    %131 = vmatpush2.msra.mxu0 0.0
    %132 = vmatprep.subr.mxu0 0.0
    %133 = vmatpush2.msra.mxu0 0.0
    %134 = vmatprep.subr.mxu0 0.0
    %135 = vmatpush2.msra.mxu0 0.0
    %136 = vmatprep.subr.mxu0 0.0
    %137 = vmatpush2.msra.mxu0 0.0
    %138 = vmatprep.subr.mxu0 0.0
    %139 = vmatpush2.msra.mxu0 0.0
    %140 = vmatprep.subr.mxu0 0.0
    %141 = vmatpush2.msra.mxu0 0.0
    %142 = vmatprep.subr.mxu0 0.0
    %143 = vmatpush2.msra.mxu0 0.0
    %144 = vmatprep.subr.mxu0 0.0
    %145 = vmatpush2.msra.mxu0 0.0
    %146 = vmatprep.subr.mxu0 0.0
    %147 = vmatpush2.msra.mxu0 0.0
    %148 = vmatprep.subr.mxu0 0.0
    %149 = vmatpush2.msra.mxu0 0.0
    %150 = vmatprep.subr.mxu0 0.0
    %151 = vmatpush2.msra.mxu0 0.0
    %152 = vmatprep.subr.mxu0 0.0
    %153 = vmatpush2.msra.mxu0 0.0
    %154 = vmatprep.mubr.f32.mxu0 0.0
    %155 = vmatmul.mubr.f32.gmra.mxu0 %v56
    %v156 = vpop.f32.mrf.mxu0
    %v157 = vadd.f32 0.0, %v156
    %v158 = vpop.f32.mrf.mxu0
    %v159 = vadd.f32 0.0, %v158
    %160 = vmatprep.mubr.f32.mxu0 0.0
    %161 = vmatmul.mubr.f32.gmra.mxu0 %v57
    %v162 = vpop.f32.mrf.mxu0
    %v163 = vadd.f32 0.0, %v162
    %v164 = vpop.f32.mrf.mxu0
    %v165 = vadd.f32 0.0, %v164
    %166 = vdwg.mxu0
    %v167 = vxor.u32 %v157, 2147483648
    %v168 = vxor.u32 %v163, 2147483648
    %v169 = vmul.f32 %v167, 1.442695
    %v170 = vpow.pop %v169
    %v171 = vmul.f32 %v168, 1.442695
    %v172 = vpow.pop %v171
    %v173 = vadd.f32 %v170, 1.0
    %v174 = vadd.f32 %v172, 1.0
    %v175 = vrcp.pop %v173
    %v176 = vmul.f32 1.0, %v175
    %v177 = vrcp.pop %v174
    %v178 = vmul.f32 1.0, %v177
    %v179 = vmul.f32 %v157, %v176
    %v180 = vmul.f32 %v163, %v178
    %v181 = vmul.f32 %v179, %v159
    %v182 = vmul.f32 %v180, %v165
    %v183 = vld [vmem:[#allocation7] sm:$0xff]
    %v184 = vld [vmem:[#allocation7 + $0x8] sm:$0xff]
    %v185 = vld [vmem:[#allocation7 + $0x10] sm:$0xff]
    %v186 = vld [vmem:[#allocation7 + $0x18] sm:$0xff]
    %v187 = vld [vmem:[#allocation7 + $0x20] sm:$0xff]
    %v188 = vld [vmem:[#allocation7 + $0x28] sm:$0xff]
    %v189 = vld [vmem:[#allocation7 + $0x30] sm:$0xff]
    %v190 = vld [vmem:[#allocation7 + $0x38] sm:$0xff]
    %v191 = vld [vmem:[#allocation7 + $0x40] sm:$0xff]
    %v192 = vld [vmem:[#allocation7 + $0x48] sm:$0xff]
    %v193 = vld [vmem:[#allocation7 + $0x50] sm:$0xff]
    %v194 = vld [vmem:[#allocation7 + $0x58] sm:$0xff]
    %v195 = vld [vmem:[#allocation7 + $0x60] sm:$0xff]
    %v196 = vld [vmem:[#allocation7 + $0x68] sm:$0xff]
    %v197 = vld [vmem:[#allocation7 + $0x70] sm:$0xff]
    %v198 = vld [vmem:[#allocation7 + $0x78] sm:$0xff]
    %199 = vmatprep.subr.mxu0 0.0
    %200 = vmatpush1.msra.mxu0 %v198
    %201 = vmatprep.subr.mxu0 0.0
    %202 = vmatpush1.msra.mxu0 %v197
    %203 = vmatprep.subr.mxu0 0.0
    %204 = vmatpush1.msra.mxu0 %v196
    %205 = vmatprep.subr.mxu0 0.0
    %206 = vmatpush1.msra.mxu0 %v195
    %207 = vmatprep.subr.mxu0 0.0
    %208 = vmatpush1.msra.mxu0 %v194
    %209 = vmatprep.subr.mxu0 0.0
    %210 = vmatpush1.msra.mxu0 %v193
    %211 = vmatprep.subr.mxu0 0.0
    %212 = vmatpush1.msra.mxu0 %v192
    %213 = vmatprep.subr.mxu0 0.0
    %214 = vmatpush1.msra.mxu0 %v191
    %215 = vmatprep.subr.mxu0 0.0
    %216 = vmatpush1.msra.mxu0 %v190
    %217 = vmatprep.subr.mxu0 0.0
    %218 = vmatpush1.msra.mxu0 %v189
    %219 = vmatprep.subr.mxu0 0.0
    %220 = vmatpush1.msra.mxu0 %v188
    %221 = vmatprep.subr.mxu0 0.0
    %222 = vmatpush1.msra.mxu0 %v187
    %223 = vmatprep.subr.mxu0 0.0
    %224 = vmatpush1.msra.mxu0 %v186
    %225 = vmatprep.subr.mxu0 0.0
    %226 = vmatpush1.msra.mxu0 %v185
    %227 = vmatprep.subr.mxu0 0.0
    %228 = vmatpush1.msra.mxu0 %v184
    %229 = vmatprep.subr.mxu0 0.0
    %230 = vmatpush1.msra.mxu0 %v183
    %231 = vmatprep.subr.mxu0 0.0
    %232 = vmatpush2.msra.mxu0 0.0
    %233 = vmatprep.subr.mxu0 0.0
    %234 = vmatpush2.msra.mxu0 0.0
    %235 = vmatprep.subr.mxu0 0.0
    %236 = vmatpush2.msra.mxu0 0.0
    %237 = vmatprep.subr.mxu0 0.0
    %238 = vmatpush2.msra.mxu0 0.0
    %239 = vmatprep.subr.mxu0 0.0
    %240 = vmatpush2.msra.mxu0 0.0
    %241 = vmatprep.subr.mxu0 0.0
    %242 = vmatpush2.msra.mxu0 0.0
    %243 = vmatprep.subr.mxu0 0.0
    %244 = vmatpush2.msra.mxu0 0.0
    %245 = vmatprep.subr.mxu0 0.0
    %246 = vmatpush2.msra.mxu0 0.0
    %247 = vmatprep.subr.mxu0 0.0
    %248 = vmatpush2.msra.mxu0 0.0
    %249 = vmatprep.subr.mxu0 0.0
    %250 = vmatpush2.msra.mxu0 0.0
    %251 = vmatprep.subr.mxu0 0.0
    %252 = vmatpush2.msra.mxu0 0.0
    %253 = vmatprep.subr.mxu0 0.0
    %254 = vmatpush2.msra.mxu0 0.0
    %255 = vmatprep.subr.mxu0 0.0
    %256 = vmatpush2.msra.mxu0 0.0
    %257 = vmatprep.subr.mxu0 0.0
    %258 = vmatpush2.msra.mxu0 0.0
    %259 = vmatprep.subr.mxu0 0.0
    %260 = vmatpush2.msra.mxu0 0.0
    %261 = vmatprep.subr.mxu0 0.0
    %262 = vmatpush2.msra.mxu0 0.0
    %263 = vmatprep.mubr.f32.mxu0 0.0
    %264 = vmatmul.mubr.f32.gmra.mxu0 %v181
    %v265 = vpop.f32.mrf.mxu0
    %v266 = vadd.f32 0.0, %v265
    %v267 = vpop.f32.mrf.mxu0
    %268 = vmatprep.mubr.f32.mxu0 0.0
    %269 = vmatmul.mubr.f32.gmra.mxu0 %v182
    %v270 = vpop.f32.mrf.mxu0
    %v271 = vadd.f32 0.0, %v270
    %v272 = vpop.f32.mrf.mxu0
    %273 = vdwg.mxu0
    %274 = vst [vmem:[#allocation8] sm:$0xff] %v266
    %275 = vst [vmem:[#allocation8 + $0x8] sm:$0xff] %v271
    // Predicated region
    $region26: #{tpu_custom_call.1} parent=1 // pred_check
      _
    $region27: #{tpu_custom_call.1} parent=1 // pred_check_branch
      %277 = sbr.rel (0) target = $region29
    $region28: #{tpu_custom_call.1} parent=1 // pred_region
      %s279 = ssub.s32 256, 256
      %280 = vsyncadd [#allocation4], %s279
      %s281 = sshll.u32 [#allocation8], 4
      %s282 = int_to_ptr.vmem [resolvable:$true] %s281
      %287 = dma.vmem_to_hbm [thread:$0]  %s282, 256, %s3, [#allocation4], 128, 128, 8
    $region29: #{tpu_custom_call.1} parent=1 // pred_fallthru
      _
    // Predicated region
    $region30: #{tpu_custom_call.1} parent=1 // pred_check
      _
    $region31: #{tpu_custom_call.1} parent=1 // pred_check_branch
      %289 = sbr.rel (0) target = $region33
    $region32: #{tpu_custom_call.1} parent=1 // pred_region
      %290 = dma.done [#allocation4], 256
    $region33: #{tpu_custom_call.1} parent=1 // pred_fallthru
      _
    %291 = vsyncpa [#allocation3], 1
    %292 = vsyncpa [#allocation6], 1
    %293 = vsyncpa [#allocation4], 1

</llo_original>
